<compile_context>
chip_gen: v5e
topology: v5e:2x2
jax: 0.10.0
libtpu: 0.0.40
codegen_flags: <defaults>
</compile_context>

<pallas_src>
import functools

import jax
import jax.numpy as jnp
from jax.experimental import pallas as pl
from jax.experimental.pallas import tpu as pltpu

_LANE = 128            # vreg lane width (last dim)
_SUBLANE = 8           # vreg sublane count (second-to-last dim)
_MAX_BLOCK_ROWS = 2048  # (2048,128) f32 block = 1 MiB/input/buffer -> 4 MiB total


def _l1_kernel(inv_n, out_ref, gt_ref, loss_ref, acc_ref):
    """Accumulate |output - gt| elementwise per lane; reduce once at the end."""
    i = pl.program_id(0)

    @pl.when(i == 0)
    def _init():
        acc_ref[...] = jnp.zeros_like(acc_ref)

    diff = out_ref[...].astype(jnp.float32) - gt_ref[...].astype(jnp.float32)
    # Pure VPU: independent per-vreg adds into the block-shaped accumulator.
    acc_ref[...] += jnp.abs(diff)

    @pl.when(i == pl.num_programs(0) - 1)
    def _finalize():
        # One cross-lane reduce + scale by the (baked-in) 1/n, done once.
        loss_ref[0, 0] = jnp.sum(acc_ref[...]) * jnp.float32(inv_n)


def l1_loss_pallas(output, gt):
    """Mean L1 distance between output and gt (any matching shapes/dtypes)."""
    assert output.shape == gt.shape, "output/gt shape mismatch"
    n = output.size
    assert n > 0

    # Row count at lane width 128, rounded up to a sublane multiple.
    total_rows = pl.cdiv(n, _LANE)
    total_rows = pl.cdiv(total_rows, _SUBLANE) * _SUBLANE
    block_rows = min(_MAX_BLOCK_ROWS, total_rows)
    padded_rows = pl.cdiv(total_rows, block_rows) * block_rows
    padded = padded_rows * _LANE

    o = output.reshape(-1)
    g = gt.reshape(-1)
    if padded != n:
        # Zero-pad only the tail (and only when needed); padded lanes
        # contribute |0 - 0| = 0. We still divide by the true element count.
        o = jnp.pad(o, (0, padded - n))
        g = jnp.pad(g, (0, padded - n))
    o2 = o.reshape(padded_rows, _LANE)
    g2 = g.reshape(padded_rows, _LANE)
    num_tiles = padded_rows // block_rows

    loss = pl.pallas_call(
        functools.partial(_l1_kernel, 1.0 / float(n)),
        out_shape=jax.ShapeDtypeStruct((1, 1), jnp.float32),
        grid_spec=pltpu.PrefetchScalarGridSpec(
            num_scalar_prefetch=0,
            grid=(num_tiles,),
            in_specs=[
                pl.BlockSpec((block_rows, _LANE), lambda i: (i, 0)),
                pl.BlockSpec((block_rows, _LANE), lambda i: (i, 0)),
            ],
            out_specs=pl.BlockSpec(memory_space=pltpu.SMEM),
            scratch_shapes=[pltpu.VMEM((block_rows, _LANE), jnp.float32)],
        ),
        compiler_params=pltpu.CompilerParams(
            dimension_semantics=("arbitrary",),  # grid axis is a reduction
        ),
    )(o2, g2)

    return loss[0, 0].astype(output.dtype)


def l1_loss_module(_input, _mask, output, gt):
    """Mirrors L1Loss.forward: _input and _mask are unused."""
    return {"reconstruction": l1_loss_pallas(output, gt)}


if __name__ == "__main__":
    key = jax.random.PRNGKey(0)
    k1, k2, k3 = jax.random.split(key, 3)

    B, C, H, W = 2, 4, 16, 16  # NCHW, matching the PyTorch convention
    _input = jax.random.normal(k1, (B, C, H, W), dtype=jnp.float32)
    _mask = jnp.ones((B, 1, H, W), dtype=jnp.float32)
    output = jax.random.normal(k2, (B, C, H, W), dtype=jnp.float32)
    gt = jax.random.normal(k3, (B, C, H, W), dtype=jnp.float32)

    result = l1_loss_module(_input, _mask, output, gt)
    loss = jax.block_until_ready(result["reconstruction"])

    # Reference check (plain JAX) for correctness.
    ref = jnp.mean(jnp.abs(output - gt))
    assert jnp.allclose(loss, ref, rtol=1e-5, atol=1e-6), (loss, ref)

    print("KERNEL_OK")
</pallas_src>

<mosaic_0001>
module attributes {stable_mosaic.version = 11 : i64} {
  func.func @_l1_kernel(%arg0: i32, %arg1: memref<16x128xf32, #tpu.memory_space<vmem>>, %arg2: memref<16x128xf32, #tpu.memory_space<vmem>>, %arg3: memref<1x1xf32, #tpu.memory_space<smem>>, %arg4: memref<16x128xf32, #tpu.memory_space<vmem>>) attributes {dimension_semantics = [#tpu.dimension_semantics<arbitrary>], iteration_bounds = array<i64: 1>, scalar_prefetch = 0 : i64, scratch_operands = 1 : i64, tpu.core_type = #tpu.core_type<tc>, window_params = [{transform_indices = @transform_0, window_bounds = array<i64: 16, 128>}, {transform_indices = @transform_1, window_bounds = array<i64: 16, 128>}, {transform_indices = @transform_2, window_bounds = array<i64: 1, 1>}]} {
    %c0_i32 = arith.constant 0 : i32
    %0 = arith.cmpi eq, %arg0, %c0_i32 : i32
    %1 = arith.extui %0 : i1 to i32
    %c0_i32_0 = arith.constant 0 : i32
    %2 = arith.cmpi ne, %1, %c0_i32_0 : i32
    scf.if %2 {
      %cst = arith.constant 0.000000e+00 : f32
      %13 = vector.broadcast %cst : f32 to vector<16x128xf32>
      %c0_10 = arith.constant 0 : index
      %c0_11 = arith.constant 0 : index
      %14 = vector.load %arg4[%c0_10, %c0_11] : memref<16x128xf32, #tpu.memory_space<vmem>>, vector<16x128xf32>
      tpu.vector_store %arg4[%c0_10, %c0_11], %13 {strides = array<i32>} : memref<16x128xf32, #tpu.memory_space<vmem>>, vector<16x128xf32>,
    } else {
    }
    %c0 = arith.constant 0 : index
    %c0_1 = arith.constant 0 : index
    %3 = vector.load %arg1[%c0, %c0_1] : memref<16x128xf32, #tpu.memory_space<vmem>>, vector<16x128xf32>
    %c0_2 = arith.constant 0 : index
    %c0_3 = arith.constant 0 : index
    %4 = vector.load %arg2[%c0_2, %c0_3] : memref<16x128xf32, #tpu.memory_space<vmem>>, vector<16x128xf32>
    %5 = arith.subf %3, %4 : vector<16x128xf32>
    %c0_4 = arith.constant 0 : index
    %c0_5 = arith.constant 0 : index
    %6 = vector.load %arg4[%c0_4, %c0_5] : memref<16x128xf32, #tpu.memory_space<vmem>>, vector<16x128xf32>
    %7 = math.absf %5 : vector<16x128xf32>
    %8 = arith.addf %6, %7 : vector<16x128xf32>
    %c0_6 = arith.constant 0 : index
    %c0_7 = arith.constant 0 : index
    %9 = vector.load %arg4[%c0_6, %c0_7] : memref<16x128xf32, #tpu.memory_space<vmem>>, vector<16x128xf32>
    tpu.vector_store %arg4[%c0_6, %c0_7], %8 {strides = array<i32>} : memref<16x128xf32, #tpu.memory_space<vmem>>, vector<16x128xf32>,
    %c0_i32_8 = arith.constant 0 : i32
    %10 = arith.cmpi eq, %arg0, %c0_i32_8 : i32
    %11 = arith.extui %10 : i1 to i32
    %c0_i32_9 = arith.constant 0 : i32
    %12 = arith.cmpi ne, %11, %c0_i32_9 : i32
    scf.if %12 {
      %c0_10 = arith.constant 0 : index
      %c0_11 = arith.constant 0 : index
      %13 = vector.load %arg4[%c0_10, %c0_11] : memref<16x128xf32, #tpu.memory_space<vmem>>, vector<16x128xf32>
      %14 = vector.shape_cast %13 : vector<16x128xf32> to vector<1x16x128xf32>
      %cst = arith.constant dense<0.000000e+00> : vector<1xf32>
      %15 = vector.multi_reduction <add>, %14, %cst [1, 2] : vector<1x16x128xf32> to vector<1xf32>
      %16 = vector.shape_cast %15 : vector<1xf32> to vector<1x1x1xf32>
      %17 = vector.extract %16[0, 0, 0] : f32 from vector<1x1x1xf32>
      %cst_12 = arith.constant 4.8828125E-4 : f32
      %18 = arith.mulf %17, %cst_12 : f32
      %c0_13 = arith.constant 0 : index
      %c0_14 = arith.constant 0 : index
      %19 = memref.load %arg3[%c0_13, %c0_14] : memref<1x1xf32, #tpu.memory_space<smem>>
      memref.store %18, %arg3[%c0_13, %c0_14] : memref<1x1xf32, #tpu.memory_space<smem>>
    } else {
    }
    return
  }
  func.func @transform_0(%arg0: i32) -> (i32, i32) {
    %c0_i32 = arith.constant 0 : i32
    %c0_i32_0 = arith.constant 0 : i32
    return %arg0, %c0_i32 : i32, i32
  }
  func.func @transform_1(%arg0: i32) -> (i32, i32) {
    %c0_i32 = arith.constant 0 : i32
    %c0_i32_0 = arith.constant 0 : i32
    return %arg0, %c0_i32 : i32, i32
  }
  func.func @transform_2(%arg0: i32) -> (i32, i32) {
    %c0_i32 = arith.constant 0 : i32
    %c0_i32_0 = arith.constant 0 : i32
    %c0_i32_1 = arith.constant 0 : i32
    return %c0_i32, %c0_i32_0 : i32, i32
  }
}

</mosaic_0001>

<llo_original>
// kernel: tpu_custom_call.1
$region0: #{tpu_custom_call.1}
  #allocation0 [shape = 'u32[]', space=smem, size = 0x4, offset = 0x4, fixed_abs, tag = 'smem constant byte address 0x4 - core index']
  #allocation1 [shape = 'u32[72,128]{1,0:T(1,128)}', space=vmem, size = 0x9000, scoped, tag = 'internal scratch']
  #allocation2 [shape = 'f32[16,128]{1,0:T(8,128)}', space=vmem, size = 0x2000, scoped, tag = 'scratch operand']
  %s0 = inlined_call_operand.hbm [shape: f32[16,128], index: 0, kind: input, shape index: {}]
  %s1 = inlined_call_operand.hbm [shape: f32[16,128], index: 1, kind: input, shape index: {}]
  %s2 = inlined_call_operand.hbm [shape: f32[1,1], index: 2, kind: output, shape index: {}]
  %s3 = sld [smem:[#allocation0]]
  $region34: #{tpu_custom_call.1} parent=0
    _
  %s5 = ssub.s32 1, %s3
  %s6 = scalar_select 0, %s5, %s3
  $region1: #{tpu_custom_call.1} parent=0
    #allocation3 [shape = 'u8[8192]{0}', space=vmem, size = 0x2000, scoped, tag = 'input window, operand 0, single buffered']
    #allocation4 [shape = 's32[1]{0}', space=sflag, size = 0x4, scoped, tag = 'scoped memory for tpu_custom_call.1']
    #allocation5 [shape = 's32[1]{0}', space=sflag, size = 0x4, scoped, tag = 'scoped memory for tpu_custom_call.1']
    #allocation6 [shape = 'u8[8192]{0}', space=vmem, size = 0x2000, scoped, tag = 'input window, operand 1, single buffered']
    #allocation7 [shape = 's32[1]{0}', space=sflag, size = 0x4, scoped, tag = 'scoped memory for tpu_custom_call.1']
    #allocation8 [shape = 'u8[512]{0}', space=smem, size = 0x200, scoped, tag = 'output window, operand 0, single buffered']
    %7 = vsyncpa [#allocation4], 0
    %8 = vsyncpa [#allocation7], 0
    %9 = vsyncpa [#allocation5], 0
    // Predicated region
    $region2: #{tpu_custom_call.1} parent=1 // pred_check
      _
    $region3: #{tpu_custom_call.1} parent=1 // pred_check_branch
      %11 = sbr.rel (0) target = $region5
    $region4: #{tpu_custom_call.1} parent=1 // pred_region
      %13 = vsyncadd [#allocation4], 0
      %s14 = sshll.u32 %s0, 4
      %s15 = int_to_ptr.hbm [resolvable:$true] %s14
      %s16 = sshll.u32 [#allocation3], 4
      %s17 = int_to_ptr.vmem [resolvable:$true] %s16
      %22 = dma.hbm_to_vmem [thread:$0]  %s15, 256, %s17, [#allocation4], 128, 128, 8
    $region5: #{tpu_custom_call.1} parent=1 // pred_fallthru
      _
    // Predicated region
    $region6: #{tpu_custom_call.1} parent=1 // pred_check
      _
    $region7: #{tpu_custom_call.1} parent=1 // pred_check_branch
      %24 = sbr.rel (0) target = $region9
    $region8: #{tpu_custom_call.1} parent=1 // pred_region
      %26 = vsyncadd [#allocation7], 0
      %s27 = sshll.u32 %s1, 4
      %s28 = int_to_ptr.hbm [resolvable:$true] %s27
      %s29 = sshll.u32 [#allocation6], 4
      %s30 = int_to_ptr.vmem [resolvable:$true] %s29
      %35 = dma.hbm_to_vmem [thread:$0]  %s28, 256, %s30, [#allocation7], 128, 128, 8
    $region9: #{tpu_custom_call.1} parent=1 // pred_fallthru
      _
    // Predicated region
    $region10: #{tpu_custom_call.1} parent=1 // pred_check
      _
    $region11: #{tpu_custom_call.1} parent=1 // pred_check_branch
      %37 = sbr.rel (0) target = $region13
    $region12: #{tpu_custom_call.1} parent=1 // pred_region
      %39 = dma.done [#allocation4], 256
    $region13: #{tpu_custom_call.1} parent=1 // pred_fallthru
      _
    // Predicated region
    $region14: #{tpu_custom_call.1} parent=1 // pred_check
      _
    $region15: #{tpu_custom_call.1} parent=1 // pred_check_branch
      %41 = sbr.rel (0) target = $region17
    $region16: #{tpu_custom_call.1} parent=1 // pred_region
      %43 = dma.done [#allocation7], 256
    $region17: #{tpu_custom_call.1} parent=1 // pred_fallthru
      _
    %p44 = scmp.eq.s32.totalorder 0, 0
    // Predicated region
    $region18: #{tpu_custom_call.1} parent=1 // pred_check
      %p45 = pneg %p44
    $region19: #{tpu_custom_call.1} parent=1 // pred_check_branch
      %47 = sbr.rel (%p45) target = $region21
    $region20: #{tpu_custom_call.1} parent=1 // pred_region
      %48 = vst [vmem:[#allocation2] sm:$0xff] 0.0
      %49 = vst [vmem:[#allocation2 + $0x8] sm:$0xff] 0.0
    $region21: #{tpu_custom_call.1} parent=1 // pred_fallthru
      _
    %v50 = vld [vmem:[#allocation3] sm:$0xff]
    %v51 = vld [vmem:[#allocation3 + $0x8] sm:$0xff]
    %v52 = vld [vmem:[#allocation6] sm:$0xff]
    %v53 = vld [vmem:[#allocation6 + $0x8] sm:$0xff]
    %v54 = vsub.f32 %v50, %v52
    %v55 = vsub.f32 %v51, %v53
    %v56 = vld [vmem:[#allocation2] sm:$0xff]
    %v57 = vld [vmem:[#allocation2 + $0x8] sm:$0xff]
    %v58 = vand.u32 2147483647, %v54
    %v59 = vand.u32 2147483647, %v55
    %v60 = vadd.f32 %v56, %v58
    %v61 = vadd.f32 %v57, %v59
    %62 = vst [vmem:[#allocation2] sm:$0xff] %v60
    %63 = vst [vmem:[#allocation2 + $0x8] sm:$0xff] %v61
    // Predicated region
    $region22: #{tpu_custom_call.1} parent=1 // pred_check
      %p64 = pneg %p44
    $region23: #{tpu_custom_call.1} parent=1 // pred_check_branch
      %66 = sbr.rel (%p64) target = $region25
    $region24: #{tpu_custom_call.1} parent=1 // pred_region
      %v67 = vld [vmem:[#allocation2] sm:$0xff]
      %v68 = vld [vmem:[#allocation2 + $0x8] sm:$0xff]
      %v69 = vadd.f32 %v67, %v68
      %70 = vadd.xlane.f32.xlu0 %v69
      %v71 = vpop.xlane.xlu0 %70
      %v72 = vrot.slane %v71, 4
      %v73 = vadd.f32 %v71, %v72
      %v74 = vrot.slane %v73, 2
      %v75 = vadd.f32 %v73, %v74
      %v76 = vrot.slane %v75, 1
      %v77 = vadd.f32 %v75, %v76
      %s78 = vtos %v77
      %s79 = smul.f32 %s78, 0.00048828125
      %s80 = scalar_lea.smem [#allocation8], 0
      %81 = sst [smem:[%s80]] %s79
    $region25: #{tpu_custom_call.1} parent=1 // pred_fallthru
      _
    // Predicated region
    $region26: #{tpu_custom_call.1} parent=1 // pred_check
      _
    $region27: #{tpu_custom_call.1} parent=1 // pred_check_branch
      %83 = sbr.rel (0) target = $region29
    $region28: #{tpu_custom_call.1} parent=1 // pred_region
      %85 = vsyncadd [#allocation5], 0
      %s87 = sshll.u32 %s2, 4
      %s88 = int_to_ptr.hbm [resolvable:$true] %s87
      %90 = dma.smem_to_hbm [#allocation8], 16, %s88, [#allocation5]
    $region29: #{tpu_custom_call.1} parent=1 // pred_fallthru
      _
    // Predicated region
    $region30: #{tpu_custom_call.1} parent=1 // pred_check
      _
    $region31: #{tpu_custom_call.1} parent=1 // pred_check_branch
      %92 = sbr.rel (0) target = $region33
    $region32: #{tpu_custom_call.1} parent=1 // pred_region
      %94 = dma.done [#allocation5], 16
    $region33: #{tpu_custom_call.1} parent=1 // pred_fallthru
      _
    %95 = sfence
    %96 = vsyncpa [#allocation4], 1
    %97 = vsyncpa [#allocation7], 1
    %98 = vsyncpa [#allocation5], 1

</llo_original>
